<compile_context>
chip_gen: v6e
topology: v6e:2x2x1
jax: 0.10.0
libtpu: 0.0.40
codegen_flags: <defaults>
</compile_context>

<pallas_src>
import jax
import jax.numpy as jnp
from jax.experimental import pallas as pl
from jax.experimental.pallas import tpu as pltpu

EMBED_DIM = 768
NUM_CLASSES = 2
LN_EPS = 1e-5


def mlp_head_kernel(x_ref, w_ref, b_ref, o_ref):
    # x_ref: (tm, EMBED_DIM)
    # w_ref: (EMBED_DIM, NUM_CLASSES)  -- LN gamma folded in
    # b_ref: (1, NUM_CLASSES)          -- LN beta folded in
    x = x_ref[...].astype(jnp.float32)

    # LayerNorm statistics over the last (lane) axis.
    mean = jnp.mean(x, axis=-1, keepdims=True)
    centered = x - mean
    var = jnp.mean(centered * centered, axis=-1, keepdims=True)
    inv_std = jax.lax.rsqrt(var + LN_EPS)

    # (centered * inv_std) @ W' == inv_std * (centered @ W'); apply the per-row
    # scale on the tiny (tm, 2) result instead of the (tm, 768) operand.
    s = jnp.dot(centered, w_ref[...], preferred_element_type=jnp.float32)
    o_ref[...] = (s * inv_std + b_ref[...]).astype(o_ref.dtype)


def mlp_head(x, gamma, beta, w_t, b, *, tm=1024):
    """x: (B, EMBED_DIM) float32 or bfloat16. Returns (B, NUM_CLASSES) in x.dtype.

    gamma, beta: (EMBED_DIM,) LayerNorm affine params.
    w_t: (EMBED_DIM, NUM_CLASSES) = transposed nn.Linear weight; b: (NUM_CLASSES,).
    """
    B, D = x.shape
    assert D == EMBED_DIM

    # Fold the LayerNorm affine into the (tiny) Linear weights.
    gamma32 = gamma.astype(jnp.float32)
    beta32 = beta.astype(jnp.float32)
    w32 = w_t.astype(jnp.float32)
    w_folded = gamma32[:, None] * w32                      # (768, 2)
    b_folded = beta32 @ w32 + b.astype(jnp.float32)        # (2,)
    b2 = b_folded.reshape(1, NUM_CLASSES)

    # Tile selection (no host-side padding of x):
    #  * B <= tm : single block spanning the full row dim (allowed even when B
    #    is not a multiple of 8, because the block equals the array dim).
    #  * B >  tm : tm-row blocks (tm is a multiple of 8); the trailing partial
    #    block is handled by Pallas' masked reads/writes.
    if B <= tm:
        tm_eff = B
    else:
        tm_eff = tm
    grid = (pl.cdiv(B, tm_eff),)

    out = pl.pallas_call(
        mlp_head_kernel,
        out_shape=jax.ShapeDtypeStruct((B, NUM_CLASSES), x.dtype),
        grid_spec=pltpu.PrefetchScalarGridSpec(
            num_scalar_prefetch=0,
            grid=grid,
            in_specs=[
                pl.BlockSpec((tm_eff, D), lambda i: (i, 0)),           # x tile
                pl.BlockSpec((D, NUM_CLASSES), lambda i: (0, 0)),      # folded W'
                pl.BlockSpec((1, NUM_CLASSES), lambda i: (0, 0)),      # folded b'
            ],
            out_specs=pl.BlockSpec((tm_eff, NUM_CLASSES), lambda i: (i, 0)),
        ),
        compiler_params=pltpu.CompilerParams(
            dimension_semantics=("parallel",),
        ),
    )(x, w_folded, b2)
    return out


def mlp_head_ref(x, gamma, beta, w_t, b):
    xf = x.astype(jnp.float32)
    mean = jnp.mean(xf, axis=-1, keepdims=True)
    var = jnp.mean((xf - mean) ** 2, axis=-1, keepdims=True)
    xn = (xf - mean) * jax.lax.rsqrt(var + LN_EPS)
    y = xn * gamma[None, :] + beta[None, :]
    return (y @ w_t + b[None, :]).astype(x.dtype)


if __name__ == "__main__":
    key = jax.random.PRNGKey(0)
    k_x, k_w, k_b, k_g, k_be = jax.random.split(key, 5)

    # Small batch, not a multiple of 8, to exercise the full-array-block path.
    B = 20
    x = jax.random.normal(k_x, (B, EMBED_DIM), dtype=jnp.float32)

    # Non-trivial LayerNorm affine so the weight fold is actually tested.
    gamma = 1.0 + 0.1 * jax.random.normal(k_g, (EMBED_DIM,), dtype=jnp.float32)
    beta = 0.1 * jax.random.normal(k_be, (EMBED_DIM,), dtype=jnp.float32)

    # PyTorch Linear init: uniform(-1/sqrt(fan_in), 1/sqrt(fan_in)); weight is (out, in).
    bound = 1.0 / (EMBED_DIM ** 0.5)
    w = jax.random.uniform(k_w, (NUM_CLASSES, EMBED_DIM), dtype=jnp.float32,
                           minval=-bound, maxval=bound)
    b = jax.random.uniform(k_b, (NUM_CLASSES,), dtype=jnp.float32,
                           minval=-bound, maxval=bound)
    w_t = w.T

    ref = mlp_head_ref(x, gamma, beta, w_t, b)

    # Default (single big block) path.
    out = jax.block_until_ready(mlp_head(x, gamma, beta, w_t, b))
    assert out.shape == (B, NUM_CLASSES)
    assert jnp.allclose(out, ref, atol=1e-4, rtol=1e-4)

    # Multi-step grid path with a partial trailing block (B=20, tm=8 -> 3 steps).
    out_small_tile = jax.block_until_ready(mlp_head(x, gamma, beta, w_t, b, tm=8))
    assert out_small_tile.shape == (B, NUM_CLASSES)
    assert jnp.allclose(out_small_tile, ref, atol=1e-4, rtol=1e-4)

    # bf16 input path (kernel upcasts internally; output in bf16).
    x_bf16 = x.astype(jnp.bfloat16)
    out_bf16 = jax.block_until_ready(mlp_head(x_bf16, gamma, beta, w_t, b))
    ref_bf16 = mlp_head_ref(x_bf16, gamma, beta, w_t, b)
    assert out_bf16.shape == (B, NUM_CLASSES)
    assert jnp.allclose(out_bf16.astype(jnp.float32), ref_bf16.astype(jnp.float32),
                        atol=3e-2, rtol=3e-2)

    print("KERNEL_OK")
</pallas_src>

<mosaic_0001>
module attributes {stable_mosaic.version = 11 : i64} {
  func.func @mlp_head_kernel(%arg0: i32, %arg1: memref<20x768xf32, #tpu.memory_space<vmem>>, %arg2: memref<768x2xf32, #tpu.memory_space<vmem>>, %arg3: memref<1x2xf32, #tpu.memory_space<vmem>>, %arg4: memref<20x2xf32, #tpu.memory_space<vmem>>) attributes {dimension_semantics = [#tpu.dimension_semantics<parallel>], iteration_bounds = array<i64: 1>, scalar_prefetch = 0 : i64, scratch_operands = 0 : i64, tpu.core_type = #tpu.core_type<tc>, window_params = [{transform_indices = @transform_0, window_bounds = array<i64: 20, 768>}, {pipeline_mode = #tpu.pipeline_mode<synchronous>, transform_indices = @transform_1, window_bounds = array<i64: 768, 2>}, {pipeline_mode = #tpu.pipeline_mode<synchronous>, transform_indices = @transform_2, window_bounds = array<i64: 1, 2>}, {transform_indices = @transform_3, window_bounds = array<i64: 20, 2>}]} {
    %c0 = arith.constant 0 : index
    %c0_0 = arith.constant 0 : index
    %0 = vector.load %arg1[%c0, %c0_0] : memref<20x768xf32, #tpu.memory_space<vmem>>, vector<20x768xf32>
    %cst = arith.constant dense<0.000000e+00> : vector<20xf32>
    %1 = vector.multi_reduction <add>, %0, %cst [1] : vector<20x768xf32> to vector<20xf32>
    %2 = vector.shape_cast %1 : vector<20xf32> to vector<20x1xf32>
    %cst_1 = arith.constant 7.680000e+02 : f32
    %3 = vector.broadcast %cst_1 : f32 to vector<20x1xf32>
    %4 = arith.divf %2, %3 : vector<20x1xf32>
    %5 = vector.broadcast %4 : vector<20x1xf32> to vector<20x768xf32>
    %6 = arith.subf %0, %5 : vector<20x768xf32>
    %7 = arith.mulf %6, %6 : vector<20x768xf32>
    %cst_2 = arith.constant dense<0.000000e+00> : vector<20xf32>
    %8 = vector.multi_reduction <add>, %7, %cst_2 [1] : vector<20x768xf32> to vector<20xf32>
    %9 = vector.shape_cast %8 : vector<20xf32> to vector<20x1xf32>
    %cst_3 = arith.constant 7.680000e+02 : f32
    %10 = vector.broadcast %cst_3 : f32 to vector<20x1xf32>
    %11 = arith.divf %9, %10 : vector<20x1xf32>
    %cst_4 = arith.constant 9.99999974E-6 : f32
    %12 = vector.broadcast %cst_4 : f32 to vector<20x1xf32>
    %13 = arith.addf %11, %12 : vector<20x1xf32>
    %14 = math.rsqrt %13 : vector<20x1xf32>
    %c0_5 = arith.constant 0 : index
    %c0_6 = arith.constant 0 : index
    %15 = vector.load %arg2[%c0_5, %c0_6] : memref<768x2xf32, #tpu.memory_space<vmem>>, vector<768x2xf32>
    %cst_7 = arith.constant dense<0.000000e+00> : vector<20x2xf32>
    %16 = tpu.matmul %6, %15, %cst_7 {dimension_numbers = #tpu.dot_dimension_numbers<[1], [0], [0], [1], [0, 0, 1, 1], [], []>} : vector<20x768xf32>, vector<768x2xf32>, vector<20x2xf32> -> vector<20x2xf32>
    %17 = vector.broadcast %14 : vector<20x1xf32> to vector<20x2xf32>
    %18 = arith.mulf %16, %17 : vector<20x2xf32>
    %c0_8 = arith.constant 0 : index
    %c0_9 = arith.constant 0 : index
    %19 = vector.load %arg3[%c0_8, %c0_9] : memref<1x2xf32, #tpu.memory_space<vmem>>, vector<1x2xf32>
    %20 = vector.broadcast %19 : vector<1x2xf32> to vector<20x2xf32>
    %21 = arith.addf %18, %20 : vector<20x2xf32>
    %c0_10 = arith.constant 0 : index
    %c0_11 = arith.constant 0 : index
    %22 = vector.load %arg4[%c0_10, %c0_11] : memref<20x2xf32, #tpu.memory_space<vmem>>, vector<20x2xf32>
    tpu.vector_store %arg4[%c0_10, %c0_11], %21 {strides = array<i32>} : memref<20x2xf32, #tpu.memory_space<vmem>>, vector<20x2xf32>,
    return
  }
  func.func @transform_0(%arg0: i32) -> (i32, i32) {
    %c0_i32 = arith.constant 0 : i32
    %c0_i32_0 = arith.constant 0 : i32
    return %arg0, %c0_i32 : i32, i32
  }
  func.func @transform_1(%arg0: i32) -> (i32, i32) {
    %c0_i32 = arith.constant 0 : i32
    %c0_i32_0 = arith.constant 0 : i32
    %c0_i32_1 = arith.constant 0 : i32
    return %c0_i32, %c0_i32_0 : i32, i32
  }
  func.func @transform_2(%arg0: i32) -> (i32, i32) {
    %c0_i32 = arith.constant 0 : i32
    %c0_i32_0 = arith.constant 0 : i32
    %c0_i32_1 = arith.constant 0 : i32
    return %c0_i32, %c0_i32_0 : i32, i32
  }
  func.func @transform_3(%arg0: i32) -> (i32, i32) {
    %c0_i32 = arith.constant 0 : i32
    %c0_i32_0 = arith.constant 0 : i32
    return %arg0, %c0_i32 : i32, i32
  }
}

</mosaic_0001>

<llo_original>
// kernel: tpu_custom_call.1
$region0: #{tpu_custom_call.1}
  #allocation0 [shape = 'u32[]', space=smem, size = 0x4, offset = 0x4, fixed_abs, tag = 'smem constant byte address 0x4 - core index']
  #allocation1 [shape = 'u32[144,128]{1,0:T(1,128)}', space=vmem, size = 0x12000, scoped, tag = 'internal scratch']
  %s0 = inlined_call_operand.vmem [shape: f32[20,768], index: 0, kind: input, shape index: {}]
  %s1 = inlined_call_operand.vmem [shape: f32[768,2], index: 1, kind: input, shape index: {}]
  %s2 = inlined_call_operand.vmem [shape: f32[1,2], index: 2, kind: input, shape index: {}]
  %s3 = inlined_call_operand.vmem [shape: f32[20,2], index: 3, kind: output, shape index: {}]
  %s4 = sld [smem:[#allocation0]]
  $region22: #{tpu_custom_call.1} parent=0
    _
  %s6 = ssub.s32 1, %s4
  %s7 = scalar_select 0, %s6, %s4
  // Predicated region
  $region2: #{tpu_custom_call.1} parent=0 // pred_check
    _
  $region3: #{tpu_custom_call.1} parent=0 // pred_check_branch
    %9 = sbr.rel (0) target = $region5
  $region4: #{tpu_custom_call.1} parent=0 // pred_region
    _
  $region5: #{tpu_custom_call.1} parent=0 // pred_fallthru
    _
  // Predicated region
  $region6: #{tpu_custom_call.1} parent=0 // pred_check
    _
  $region7: #{tpu_custom_call.1} parent=0 // pred_check_branch
    %11 = sbr.rel (0) target = $region9
  $region8: #{tpu_custom_call.1} parent=0 // pred_region
    _
  $region9: #{tpu_custom_call.1} parent=0 // pred_fallthru
    _
  // Predicated region
  $region10: #{tpu_custom_call.1} parent=0 // pred_check
    _
  $region11: #{tpu_custom_call.1} parent=0 // pred_check_branch
    %13 = sbr.rel (0) target = $region13
  $region12: #{tpu_custom_call.1} parent=0 // pred_region
    _
  $region13: #{tpu_custom_call.1} parent=0 // pred_fallthru
    _
  %v14 = vld [vmem:[%s0] sm:$0xff]
  %v15 = vld [vmem:[%s0 + $0x8] sm:$0xff]
  %v16 = vld [vmem:[%s0 + $0x10] sm:$0xff]
  %v17 = vld [vmem:[%s0 + $0x18] sm:$0xff]
  %v18 = vld [vmem:[%s0 + $0x20] sm:$0xff]
  %v19 = vld [vmem:[%s0 + $0x28] sm:$0xff]
  %v20 = vld [vmem:[%s0 + $0x30] sm:$0xff]
  %v21 = vld [vmem:[%s0 + $0x38] sm:$0xff]
  %v22 = vld [vmem:[%s0 + $0x40] sm:$0xff]
  %v23 = vld [vmem:[%s0 + $0x48] sm:$0xff]
  %v24 = vld [vmem:[%s0 + $0x50] sm:$0xff]
  %v25 = vld [vmem:[%s0 + $0x58] sm:$0xff]
  %v26 = vld [vmem:[%s0 + $0x60] sm:$0xf]
  %v27 = vld [vmem:[%s0 + $0x68] sm:$0xf]
  %v28 = vld [vmem:[%s0 + $0x70] sm:$0xf]
  %v29 = vld [vmem:[%s0 + $0x78] sm:$0xf]
  %v30 = vld [vmem:[%s0 + $0x80] sm:$0xf]
  %v31 = vld [vmem:[%s0 + $0x88] sm:$0xf]
  %v32 = vadd.f32 %v14, %v15
  %v33 = vadd.f32 %v32, %v16
  %v34 = vadd.f32 %v33, %v17
  %v35 = vadd.f32 %v34, %v18
  %v36 = vadd.f32 %v35, %v19
  %37 = vadd.xlane.f32.xlu0 %v36
  %v38 = vpop.xlane.xlu0 %37
  %v39 = vadd.f32 %v20, %v21
  %v40 = vadd.f32 %v39, %v22
  %v41 = vadd.f32 %v40, %v23
  %v42 = vadd.f32 %v41, %v24
  %v43 = vadd.f32 %v42, %v25
  %44 = vadd.xlane.f32.xlu0 %v43
  %v45 = vpop.xlane.xlu0 %44
  %vm46 = vcmask 1043456
  %v47 = vsel %vm46, %v26, 0.0
  %v48 = vsel %vm46, %v27, 0.0
  %v49 = vadd.f32 %v47, %v48
  %v50 = vsel %vm46, %v28, 0.0
  %v51 = vadd.f32 %v49, %v50
  %v52 = vsel %vm46, %v29, 0.0
  %v53 = vadd.f32 %v51, %v52
  %v54 = vsel %vm46, %v30, 0.0
  %v55 = vadd.f32 %v53, %v54
  %v56 = vsel %vm46, %v31, 0.0
  %v57 = vadd.f32 %v55, %v56
  %58 = vadd.xlane.f32.xlu0 %v57
  %v59 = vpop.xlane.xlu0 %58
  %v60 = vrcp.pop 768.0
  %v61 = vmul.f32 %v38, %v60
  %v62 = vmul.f32 %v45, %v60
  %v63 = vmul.f32 %v59, %v60
  %v64 = vsub.f32 %v14, %v61
  %v65 = vsub.f32 %v15, %v61
  %v66 = vsub.f32 %v16, %v61
  %v67 = vsub.f32 %v17, %v61
  %v68 = vsub.f32 %v18, %v61
  %v69 = vsub.f32 %v19, %v61
  %v70 = vsub.f32 %v20, %v62
  %v71 = vsub.f32 %v21, %v62
  %v72 = vsub.f32 %v22, %v62
  %v73 = vsub.f32 %v23, %v62
  %v74 = vsub.f32 %v24, %v62
  %v75 = vsub.f32 %v25, %v62
  %v76 = vsub.f32 %v26, %v63
  %v77 = vsub.f32 %v27, %v63
  %v78 = vsub.f32 %v28, %v63
  %v79 = vsub.f32 %v29, %v63
  %v80 = vsub.f32 %v30, %v63
  %v81 = vsub.f32 %v31, %v63
  %v82 = vmul.f32 %v64, %v64
  %v83 = vmul.f32 %v65, %v65
  %v84 = vmul.f32 %v66, %v66
  %v85 = vmul.f32 %v67, %v67
  %v86 = vmul.f32 %v68, %v68
  %v87 = vmul.f32 %v69, %v69
  %v88 = vmul.f32 %v70, %v70
  %v89 = vmul.f32 %v71, %v71
  %v90 = vmul.f32 %v72, %v72
  %v91 = vmul.f32 %v73, %v73
  %v92 = vmul.f32 %v74, %v74
  %v93 = vmul.f32 %v75, %v75
  %v94 = vmul.f32 %v76, %v76
  %v95 = vmul.f32 %v77, %v77
  %v96 = vmul.f32 %v78, %v78
  %v97 = vmul.f32 %v79, %v79
  %v98 = vmul.f32 %v80, %v80
  %v99 = vmul.f32 %v81, %v81
  %v100 = vadd.f32 %v82, %v83
  %v101 = vadd.f32 %v100, %v84
  %v102 = vadd.f32 %v101, %v85
  %v103 = vadd.f32 %v102, %v86
  %v104 = vadd.f32 %v103, %v87
  %105 = vadd.xlane.f32.xlu0 %v104
  %v106 = vpop.xlane.xlu0 %105
  %v107 = vadd.f32 %v88, %v89
  %v108 = vadd.f32 %v107, %v90
  %v109 = vadd.f32 %v108, %v91
  %v110 = vadd.f32 %v109, %v92
  %v111 = vadd.f32 %v110, %v93
  %112 = vadd.xlane.f32.xlu0 %v111
  %v113 = vpop.xlane.xlu0 %112
  %v114 = vsel %vm46, %v94, 0.0
  %v115 = vsel %vm46, %v95, 0.0
  %v116 = vadd.f32 %v114, %v115
  %v117 = vsel %vm46, %v96, 0.0
  %v118 = vadd.f32 %v116, %v117
  %v119 = vsel %vm46, %v97, 0.0
  %v120 = vadd.f32 %v118, %v119
  %v121 = vsel %vm46, %v98, 0.0
  %v122 = vadd.f32 %v120, %v121
  %v123 = vsel %vm46, %v99, 0.0
  %v124 = vadd.f32 %v122, %v123
  %125 = vadd.xlane.f32.xlu0 %v124
  %v126 = vpop.xlane.xlu0 %125
  %v127 = vmul.f32 %v106, %v60
  %v128 = vmul.f32 %v113, %v60
  %v129 = vmul.f32 %v126, %v60
  %v130 = vadd.f32 %v127, 1e-05
  %v131 = vadd.f32 %v128, 1e-05
  %v132 = vadd.f32 %v129, 1e-05
  %v133 = vrsqrt.pop %v130
  %v134 = vrsqrt.pop %v131
  %v135 = vrsqrt.pop %v132
  %v136 = vld [vmem:[%s1] sm:$0xff]
  %v137 = vld [vmem:[%s1 + $0x8] sm:$0xff]
  %v138 = vld [vmem:[%s1 + $0x10] sm:$0xff]
  %v139 = vld [vmem:[%s1 + $0x18] sm:$0xff]
  %v140 = vld [vmem:[%s1 + $0x20] sm:$0xff]
  %v141 = vld [vmem:[%s1 + $0x28] sm:$0xff]
  %v142 = vld [vmem:[%s1 + $0x30] sm:$0xff]
  %v143 = vld [vmem:[%s1 + $0x38] sm:$0xff]
  %v144 = vld [vmem:[%s1 + $0x40] sm:$0xff]
  %v145 = vld [vmem:[%s1 + $0x48] sm:$0xff]
  %v146 = vld [vmem:[%s1 + $0x50] sm:$0xff]
  %v147 = vld [vmem:[%s1 + $0x58] sm:$0xff]
  %v148 = vld [vmem:[%s1 + $0x60] sm:$0xff]
  %v149 = vld [vmem:[%s1 + $0x68] sm:$0xff]
  %v150 = vld [vmem:[%s1 + $0x70] sm:$0xff]
  %v151 = vld [vmem:[%s1 + $0x78] sm:$0xff]
  %v152 = vld [vmem:[%s1 + $0x80] sm:$0xff]
  %v153 = vld [vmem:[%s1 + $0x88] sm:$0xff]
  %v154 = vld [vmem:[%s1 + $0x90] sm:$0xff]
  %v155 = vld [vmem:[%s1 + $0x98] sm:$0xff]
  %v156 = vld [vmem:[%s1 + $0xa0] sm:$0xff]
  %v157 = vld [vmem:[%s1 + $0xa8] sm:$0xff]
  %v158 = vld [vmem:[%s1 + $0xb0] sm:$0xff]
  %v159 = vld [vmem:[%s1 + $0xb8] sm:$0xff]
  %v160 = vld [vmem:[%s1 + $0xc0] sm:$0xff]
  %v161 = vld [vmem:[%s1 + $0xc8] sm:$0xff]
  %v162 = vld [vmem:[%s1 + $0xd0] sm:$0xff]
  %v163 = vld [vmem:[%s1 + $0xd8] sm:$0xff]
  %v164 = vld [vmem:[%s1 + $0xe0] sm:$0xff]
  %v165 = vld [vmem:[%s1 + $0xe8] sm:$0xff]
  %v166 = vld [vmem:[%s1 + $0xf0] sm:$0xff]
  %v167 = vld [vmem:[%s1 + $0xf8] sm:$0xff]
  %v168 = vld [vmem:[%s1 + $0x100] sm:$0xff]
  %v169 = vld [vmem:[%s1 + $0x108] sm:$0xff]
  %v170 = vld [vmem:[%s1 + $0x110] sm:$0xff]
  %v171 = vld [vmem:[%s1 + $0x118] sm:$0xff]
  %v172 = vld [vmem:[%s1 + $0x120] sm:$0xff]
  %v173 = vld [vmem:[%s1 + $0x128] sm:$0xff]
  %v174 = vld [vmem:[%s1 + $0x130] sm:$0xff]
  %v175 = vld [vmem:[%s1 + $0x138] sm:$0xff]
  %v176 = vld [vmem:[%s1 + $0x140] sm:$0xff]
  %v177 = vld [vmem:[%s1 + $0x148] sm:$0xff]
  %v178 = vld [vmem:[%s1 + $0x150] sm:$0xff]
  %v179 = vld [vmem:[%s1 + $0x158] sm:$0xff]
  %v180 = vld [vmem:[%s1 + $0x160] sm:$0xff]
  %v181 = vld [vmem:[%s1 + $0x168] sm:$0xff]
  %v182 = vld [vmem:[%s1 + $0x170] sm:$0xff]
  %v183 = vld [vmem:[%s1 + $0x178] sm:$0xff]
  %v184 = vld [vmem:[%s1 + $0x180] sm:$0xff]
  %v185 = vld [vmem:[%s1 + $0x188] sm:$0xff]
  %v186 = vld [vmem:[%s1 + $0x190] sm:$0xff]
  %v187 = vld [vmem:[%s1 + $0x198] sm:$0xff]
  %v188 = vld [vmem:[%s1 + $0x1a0] sm:$0xff]
  %v189 = vld [vmem:[%s1 + $0x1a8] sm:$0xff]
  %v190 = vld [vmem:[%s1 + $0x1b0] sm:$0xff]
  %v191 = vld [vmem:[%s1 + $0x1b8] sm:$0xff]
  %v192 = vld [vmem:[%s1 + $0x1c0] sm:$0xff]
  %v193 = vld [vmem:[%s1 + $0x1c8] sm:$0xff]
  %v194 = vld [vmem:[%s1 + $0x1d0] sm:$0xff]
  %v195 = vld [vmem:[%s1 + $0x1d8] sm:$0xff]
  %v196 = vld [vmem:[%s1 + $0x1e0] sm:$0xff]
  %v197 = vld [vmem:[%s1 + $0x1e8] sm:$0xff]
  %v198 = vld [vmem:[%s1 + $0x1f0] sm:$0xff]
  %v199 = vld [vmem:[%s1 + $0x1f8] sm:$0xff]
  %v200 = vld [vmem:[%s1 + $0x200] sm:$0xff]
  %v201 = vld [vmem:[%s1 + $0x208] sm:$0xff]
  %v202 = vld [vmem:[%s1 + $0x210] sm:$0xff]
  %v203 = vld [vmem:[%s1 + $0x218] sm:$0xff]
  %v204 = vld [vmem:[%s1 + $0x220] sm:$0xff]
  %v205 = vld [vmem:[%s1 + $0x228] sm:$0xff]
  %v206 = vld [vmem:[%s1 + $0x230] sm:$0xff]
  %v207 = vld [vmem:[%s1 + $0x238] sm:$0xff]
  %v208 = vld [vmem:[%s1 + $0x240] sm:$0xff]
  %v209 = vld [vmem:[%s1 + $0x248] sm:$0xff]
  %v210 = vld [vmem:[%s1 + $0x250] sm:$0xff]
  %v211 = vld [vmem:[%s1 + $0x258] sm:$0xff]
  %v212 = vld [vmem:[%s1 + $0x260] sm:$0xff]
  %v213 = vld [vmem:[%s1 + $0x268] sm:$0xff]
  %v214 = vld [vmem:[%s1 + $0x270] sm:$0xff]
  %v215 = vld [vmem:[%s1 + $0x278] sm:$0xff]
  %v216 = vld [vmem:[%s1 + $0x280] sm:$0xff]
  %v217 = vld [vmem:[%s1 + $0x288] sm:$0xff]
  %v218 = vld [vmem:[%s1 + $0x290] sm:$0xff]
  %v219 = vld [vmem:[%s1 + $0x298] sm:$0xff]
  %v220 = vld [vmem:[%s1 + $0x2a0] sm:$0xff]
  %v221 = vld [vmem:[%s1 + $0x2a8] sm:$0xff]
  %v222 = vld [vmem:[%s1 + $0x2b0] sm:$0xff]
  %v223 = vld [vmem:[%s1 + $0x2b8] sm:$0xff]
  %v224 = vld [vmem:[%s1 + $0x2c0] sm:$0xff]
  %v225 = vld [vmem:[%s1 + $0x2c8] sm:$0xff]
  %v226 = vld [vmem:[%s1 + $0x2d0] sm:$0xff]
  %v227 = vld [vmem:[%s1 + $0x2d8] sm:$0xff]
  %v228 = vld [vmem:[%s1 + $0x2e0] sm:$0xff]
  %v229 = vld [vmem:[%s1 + $0x2e8] sm:$0xff]
  %v230 = vld [vmem:[%s1 + $0x2f0] sm:$0xff]
  %v231 = vld [vmem:[%s1 + $0x2f8] sm:$0xff]
  %232 = vmatprep.subr.mxu0 0.0
  %233 = vmatpush1.msra.mxu0 %v151
  %234 = vmatprep.subr.mxu0 0.0
  %235 = vmatpush1.msra.mxu0 %v150
  %236 = vmatprep.subr.mxu0 0.0
  %237 = vmatpush1.msra.mxu0 %v149
  %238 = vmatprep.subr.mxu0 0.0
  %239 = vmatpush1.msra.mxu0 %v148
  %240 = vmatprep.subr.mxu0 0.0
  %241 = vmatpush1.msra.mxu0 %v147
  %242 = vmatprep.subr.mxu0 0.0
  %243 = vmatpush1.msra.mxu0 %v146
  %244 = vmatprep.subr.mxu0 0.0
  %245 = vmatpush1.msra.mxu0 %v145
  %246 = vmatprep.subr.mxu0 0.0
  %247 = vmatpush1.msra.mxu0 %v144
  %248 = vmatprep.subr.mxu0 0.0
  %249 = vmatpush1.msra.mxu0 %v143
  %250 = vmatprep.subr.mxu0 0.0
  %251 = vmatpush1.msra.mxu0 %v142
  %252 = vmatprep.subr.mxu0 0.0
  %253 = vmatpush1.msra.mxu0 %v141
  %254 = vmatprep.subr.mxu0 0.0
  %255 = vmatpush1.msra.mxu0 %v140
  %256 = vmatprep.subr.mxu0 0.0
  %257 = vmatpush1.msra.mxu0 %v139
  %258 = vmatprep.subr.mxu0 0.0
  %259 = vmatpush1.msra.mxu0 %v138
  %260 = vmatprep.subr.mxu0 0.0
  %261 = vmatpush1.msra.mxu0 %v137
  %262 = vmatprep.subr.mxu0 0.0
  %263 = vmatpush1.msra.mxu0 %v136
  %264 = vmatprep.subr.mxu0 0.0
  %265 = vmatpush2.msra.mxu0 %v167
  %266 = vmatprep.subr.mxu0 0.0
  %267 = vmatpush2.msra.mxu0 %v166
  %268 = vmatprep.subr.mxu0 0.0
  %269 = vmatpush2.msra.mxu0 %v165
  %270 = vmatprep.subr.mxu0 0.0
  %271 = vmatpush2.msra.mxu0 %v164
  %272 = vmatprep.subr.mxu0 0.0
  %273 = vmatpush2.msra.mxu0 %v163
  %274 = vmatprep.subr.mxu0 0.0
  %275 = vmatpush2.msra.mxu0 %v162
  %276 = vmatprep.subr.mxu0 0.0
  %277 = vmatpush2.msra.mxu0 %v161
  %278 = vmatprep.subr.mxu0 0.0
  %279 = vmatpush2.msra.mxu0 %v160
  %280 = vmatprep.subr.mxu0 0.0
  %281 = vmatpush2.msra.mxu0 %v159
  %282 = vmatprep.subr.mxu0 0.0
  %283 = vmatpush2.msra.mxu0 %v158
  %284 = vmatprep.subr.mxu0 0.0
  %285 = vmatpush2.msra.mxu0 %v157
  %286 = vmatprep.subr.mxu0 0.0
  %287 = vmatpush2.msra.mxu0 %v156
  %288 = vmatprep.subr.mxu0 0.0
  %289 = vmatpush2.msra.mxu0 %v155
  %290 = vmatprep.subr.mxu0 0.0
  %291 = vmatpush2.msra.mxu0 %v154
  %292 = vmatprep.subr.mxu0 0.0
  %293 = vmatpush2.msra.mxu0 %v153
  %294 = vmatprep.subr.mxu0 0.0
  %295 = vmatpush2.msra.mxu0 %v152
  %296 = vmatprep.mubr.f32.mxu0 %v65
  %297 = vmatmul.mubr.f32.gmra.mxu0 %v64
  %v298 = vpop.f32.mrf.mxu0
  %v299 = vadd.f32 0.0, %v298
  %v300 = vpop.f32.mrf.mxu0
  %301 = vmatprep.mubr.f32.mxu0 %v71
  %302 = vmatmul.mubr.f32.gmra.mxu0 %v70
  %v303 = vpop.f32.mrf.mxu0
  %v304 = vadd.f32 0.0, %v303
  %v305 = vpop.f32.mrf.mxu0
  %306 = vmatprep.mubr.f32.mxu0 %v77
  %307 = vmatmul.mubr.f32.gmra.mxu0 %v76
  %v308 = vpop.f32.mrf.mxu0
  %v309 = vadd.f32 0.0, %v308
  %v310 = vpop.f32.mrf.mxu0
  %311 = vdwg.mxu0
  %312 = vmatprep.subr.mxu0 0.0
  %313 = vmatpush1.msra.mxu0 %v183
  %314 = vmatprep.subr.mxu0 0.0
  %315 = vmatpush1.msra.mxu0 %v182
  %316 = vmatprep.subr.mxu0 0.0
  %317 = vmatpush1.msra.mxu0 %v181
  %318 = vmatprep.subr.mxu0 0.0
  %319 = vmatpush1.msra.mxu0 %v180
  %320 = vmatprep.subr.mxu0 0.0
  %321 = vmatpush1.msra.mxu0 %v179
  %322 = vmatprep.subr.mxu0 0.0
  %323 = vmatpush1.msra.mxu0 %v178
  %324 = vmatprep.subr.mxu0 0.0
  %325 = vmatpush1.msra.mxu0 %v177
  %326 = vmatprep.subr.mxu0 0.0
  %327 = vmatpush1.msra.mxu0 %v176
  %328 = vmatprep.subr.mxu0 0.0
  %329 = vmatpush1.msra.mxu0 %v175
  %330 = vmatprep.subr.mxu0 0.0
  %331 = vmatpush1.msra.mxu0 %v174
  %332 = vmatprep.subr.mxu0 0.0
  %333 = vmatpush1.msra.mxu0 %v173
  %334 = vmatprep.subr.mxu0 0.0
  %335 = vmatpush1.msra.mxu0 %v172
  %336 = vmatprep.subr.mxu0 0.0
  %337 = vmatpush1.msra.mxu0 %v171
  %338 = vmatprep.subr.mxu0 0.0
  %339 = vmatpush1.msra.mxu0 %v170
  %340 = vmatprep.subr.mxu0 0.0
  %341 = vmatpush1.msra.mxu0 %v169
  %342 = vmatprep.subr.mxu0 0.0
  %343 = vmatpush1.msra.mxu0 %v168
  %344 = vmatprep.subr.mxu0 0.0
  %345 = vmatpush2.msra.mxu0 %v199
  %346 = vmatprep.subr.mxu0 0.0
  %347 = vmatpush2.msra.mxu0 %v198
  %348 = vmatprep.subr.mxu0 0.0
  %349 = vmatpush2.msra.mxu0 %v197
  %350 = vmatprep.subr.mxu0 0.0
  %351 = vmatpush2.msra.mxu0 %v196
  %352 = vmatprep.subr.mxu0 0.0
  %353 = vmatpush2.msra.mxu0 %v195
  %354 = vmatprep.subr.mxu0 0.0
  %355 = vmatpush2.msra.mxu0 %v194
  %356 = vmatprep.subr.mxu0 0.0
  %357 = vmatpush2.msra.mxu0 %v193
  %358 = vmatprep.subr.mxu0 0.0
  %359 = vmatpush2.msra.mxu0 %v192
  %360 = vmatprep.subr.mxu0 0.0
  %361 = vmatpush2.msra.mxu0 %v191
  %362 = vmatprep.subr.mxu0 0.0
  %363 = vmatpush2.msra.mxu0 %v190
  %364 = vmatprep.subr.mxu0 0.0
  %365 = vmatpush2.msra.mxu0 %v189
  %366 = vmatprep.subr.mxu0 0.0
  %367 = vmatpush2.msra.mxu0 %v188
  %368 = vmatprep.subr.mxu0 0.0
  %369 = vmatpush2.msra.mxu0 %v187
  %370 = vmatprep.subr.mxu0 0.0
  %371 = vmatpush2.msra.mxu0 %v186
  %372 = vmatprep.subr.mxu0 0.0
  %373 = vmatpush2.msra.mxu0 %v185
  %374 = vmatprep.subr.mxu0 0.0
  %375 = vmatpush2.msra.mxu0 %v184
  %376 = vmatprep.mubr.f32.mxu0 %v67
  %377 = vmatmul.mubr.f32.gmra.mxu0 %v66
  %v378 = vpop.f32.mrf.mxu0
  %v379 = vadd.f32 %v299, %v378
  %v380 = vpop.f32.mrf.mxu0
  %381 = vmatprep.mubr.f32.mxu0 %v73
  %382 = vmatmul.mubr.f32.gmra.mxu0 %v72
  %v383 = vpop.f32.mrf.mxu0
  %v384 = vadd.f32 %v304, %v383
  %v385 = vpop.f32.mrf.mxu0
  %386 = vmatprep.mubr.f32.mxu0 %v79
  %387 = vmatmul.mubr.f32.gmra.mxu0 %v78
  %v388 = vpop.f32.mrf.mxu0
  %v389 = vadd.f32 %v309, %v388
  %v390 = vpop.f32.mrf.mxu0
  %391 = vdwg.mxu0
  %392 = vmatprep.subr.mxu0 0.0
  %393 = vmatpush1.msra.mxu0 %v215
  %394 = vmatprep.subr.mxu0 0.0
  %395 = vmatpush1.msra.mxu0 %v214
  %396 = vmatprep.subr.mxu0 0.0
  %397 = vmatpush1.msra.mxu0 %v213
  %398 = vmatprep.subr.mxu0 0.0
  %399 = vmatpush1.msra.mxu0 %v212
  %400 = vmatprep.subr.mxu0 0.0
  %401 = vmatpush1.msra.mxu0 %v211
  %402 = vmatprep.subr.mxu0 0.0
  %403 = vmatpush1.msra.mxu0 %v210
  %404 = vmatprep.subr.mxu0 0.0
  %405 = vmatpush1.msra.mxu0 %v209
  %406 = vmatprep.subr.mxu0 0.0
  %407 = vmatpush1.msra.mxu0 %v208
  %408 = vmatprep.subr.mxu0 0.0
  %409 = vmatpush1.msra.mxu0 %v207
  %410 = vmatprep.subr.mxu0 0.0
  %411 = vmatpush1.msra.mxu0 %v206
  %412 = vmatprep.subr.mxu0 0.0
  %413 = vmatpush1.msra.mxu0 %v205
  %414 = vmatprep.subr.mxu0 0.0
  %415 = vmatpush1.msra.mxu0 %v204
  %416 = vmatprep.subr.mxu0 0.0
  %417 = vmatpush1.msra.mxu0 %v203
  %418 = vmatprep.subr.mxu0 0.0
  %419 = vmatpush1.msra.mxu0 %v202
  %420 = vmatprep.subr.mxu0 0.0
  %421 = vmatpush1.msra.mxu0 %v201
  %422 = vmatprep.subr.mxu0 0.0
  %423 = vmatpush1.msra.mxu0 %v200
  %424 = vmatprep.subr.mxu0 0.0
  %425 = vmatpush2.msra.mxu0 %v231
  %426 = vmatprep.subr.mxu0 0.0
  %427 = vmatpush2.msra.mxu0 %v230
  %428 = vmatprep.subr.mxu0 0.0
  %429 = vmatpush2.msra.mxu0 %v229
  %430 = vmatprep.subr.mxu0 0.0
  %431 = vmatpush2.msra.mxu0 %v228
  %432 = vmatprep.subr.mxu0 0.0
  %433 = vmatpush2.msra.mxu0 %v227
  %434 = vmatprep.subr.mxu0 0.0
  %435 = vmatpush2.msra.mxu0 %v226
  %436 = vmatprep.subr.mxu0 0.0
  %437 = vmatpush2.msra.mxu0 %v225
  %438 = vmatprep.subr.mxu0 0.0
  %439 = vmatpush2.msra.mxu0 %v224
  %440 = vmatprep.subr.mxu0 0.0
  %441 = vmatpush2.msra.mxu0 %v223
  %442 = vmatprep.subr.mxu0 0.0
  %443 = vmatpush2.msra.mxu0 %v222
  %444 = vmatprep.subr.mxu0 0.0
  %445 = vmatpush2.msra.mxu0 %v221
  %446 = vmatprep.subr.mxu0 0.0
  %447 = vmatpush2.msra.mxu0 %v220
  %448 = vmatprep.subr.mxu0 0.0
  %449 = vmatpush2.msra.mxu0 %v219
  %450 = vmatprep.subr.mxu0 0.0
  %451 = vmatpush2.msra.mxu0 %v218
  %452 = vmatprep.subr.mxu0 0.0
  %453 = vmatpush2.msra.mxu0 %v217
  %454 = vmatprep.subr.mxu0 0.0
  %455 = vmatpush2.msra.mxu0 %v216
  %456 = vmatprep.mubr.f32.mxu0 %v69
  %457 = vmatmul.mubr.f32.gmra.mxu0 %v68
  %v458 = vpop.f32.mrf.mxu0
  %v459 = vadd.f32 %v379, %v458
  %v460 = vpop.f32.mrf.mxu0
  %461 = vmatprep.mubr.f32.mxu0 %v75
  %462 = vmatmul.mubr.f32.gmra.mxu0 %v74
  %v463 = vpop.f32.mrf.mxu0
  %v464 = vadd.f32 %v384, %v463
  %v465 = vpop.f32.mrf.mxu0
  %466 = vmatprep.mubr.f32.mxu0 %v81
  %467 = vmatmul.mubr.f32.gmra.mxu0 %v80
  %v468 = vpop.f32.mrf.mxu0
  %v469 = vadd.f32 %v389, %v468
  %v470 = vpop.f32.mrf.mxu0
  %471 = vdwg.mxu0
  %v472 = vmul.f32 %v459, %v133
  %v473 = vmul.f32 %v464, %v134
  %v474 = vmul.f32 %v469, %v135
  %v475 = vld [vmem:[%s2] sm:$0x1]
  %v477 = vlaneseq
  %v478 = vshrl.u32 %v477, 7
  %v479 = vsub.s32 0, %v478
  %v480 = vrot.slane %v475, %v479
  %v482 = vadd.f32 %v472, %v480
  %v483 = vadd.f32 %v473, %v480
  %v484 = vadd.f32 %v474, %v480
  %vm485 = vcmask 15360
  %486 = vst.msk [vmem:[%s3] sm:$0xff] %vm485, %v482
  %487 = vst.msk [vmem:[%s3 + $0x8] sm:$0xff] %vm485, %v483
  %vm488 = vcmask 11264
  %489 = vst.msk [vmem:[%s3 + $0x10] sm:$0xf] %vm488, %v484
  // Predicated region
  $region14: #{tpu_custom_call.1} parent=0 // pred_check
    _
  $region15: #{tpu_custom_call.1} parent=0 // pred_check_branch
    %491 = sbr.rel (0) target = $region17
  $region16: #{tpu_custom_call.1} parent=0 // pred_region
    _
  $region17: #{tpu_custom_call.1} parent=0 // pred_fallthru
    _
  // Predicated region
  $region18: #{tpu_custom_call.1} parent=0 // pred_check
    _
  $region19: #{tpu_custom_call.1} parent=0 // pred_check_branch
    %493 = sbr.rel (0) target = $region21
  $region20: #{tpu_custom_call.1} parent=0 // pred_region
    _
  $region21: #{tpu_custom_call.1} parent=0 // pred_fallthru
    _

</llo_original>
